<compile_context>
chip_gen: v7x
topology: tpu7x:2x2x1
jax: 0.10.0
libtpu: 0.0.40
codegen_flags: <defaults>
</compile_context>

<pallas_src>
import functools

import jax
import jax.numpy as jnp
from jax.experimental import pallas as pl
from jax.experimental.pallas import tpu as pltpu

LANES = 128      # TPU vreg lane width; feature dims padded to a multiple of this.
SUBLANES = 16    # bf16 sublane packing; batch padded to a multiple of this.


def _round_up(n, m):
    return ((n + m - 1) // m) * m


def _pad2d(a, rows, cols):
    r, c = a.shape
    if r == rows and c == cols:
        return a
    return jnp.pad(a, ((0, rows - r), (0, cols - c)))


def _mlp_kernel(x_ref, w1_ref, b1_ref, w2_ref, b2_ref, w3_ref, b3_ref, o_ref):
    # Dropouts (in_drop / fc1_drop / fc2_drop) are identity in eval mode.
    # fc1 + bias + relu: f32 accumulate, bias/relu in f32, single cast to bf16.
    h = jnp.dot(x_ref[...], w1_ref[...], preferred_element_type=jnp.float32)
    h = jnp.maximum(h + b1_ref[...], 0.0).astype(w2_ref.dtype)

    # fc2 + bias + relu.
    # TODO(synk): for hidden >= ~2K tile this dot over K/N (reduction axis last,
    # "arbitrary", f32 scratch accumulator) so w2 is never fully resident, and
    # chunk h into 512-lane slices if ld/st spills appear at large block_b.
    h = jnp.dot(h, w2_ref[...], preferred_element_type=jnp.float32)
    h = jnp.maximum(h + b2_ref[...], 0.0).astype(w3_ref.dtype)

    # fc3 (no activation).
    o = jnp.dot(h, w3_ref[...], preferred_element_type=jnp.float32) + b3_ref[...]
    o_ref[...] = o.astype(o_ref.dtype)


def prepare_mlp_params(w1, b1, w2, b2, w3, b3, compute_dtype=jnp.bfloat16):
    """Pad feature dims to 128 lanes and cast to compute_dtype ONCE.

    w_i: [in_i, out_i] (transpose of PyTorch's [out, in]); b_i: [out_i] or [1, out_i].
    Returns (params_tuple, (in_size, hidden, out_size)).
    """
    in_size, hidden = w1.shape
    out_size = w3.shape[1]
    INp = _round_up(in_size, LANES)
    HIDp = _round_up(hidden, LANES)
    OUTp = _round_up(out_size, LANES)
    params = (
        _pad2d(w1, INp, HIDp).astype(compute_dtype),
        _pad2d(jnp.reshape(b1, (1, -1)), 1, HIDp).astype(jnp.float32),
        _pad2d(w2, HIDp, HIDp).astype(compute_dtype),
        _pad2d(jnp.reshape(b2, (1, -1)), 1, HIDp).astype(jnp.float32),
        _pad2d(w3, HIDp, OUTp).astype(compute_dtype),
        _pad2d(jnp.reshape(b3, (1, -1)), 1, OUTp).astype(jnp.float32),
    )
    # Materialize now so no pad/cast HBM traffic remains on the call path.
    params = tuple(jax.block_until_ready(p) for p in params)
    return params, (in_size, hidden, out_size)


def _vmem_limit_bytes(footprint_bytes):
    """Generation-aware VMEM limit: enough for the tiles, never the full chip."""
    try:
        cap = int(pltpu.get_tpu_info().vmem_capacity_bytes)
    except Exception:
        cap = 64 * 1024 * 1024           # conservative: v7x per-TC VMEM
    ceiling = cap - 8 * 1024 * 1024      # headroom for compiler scratch
    want = max(32 * 1024 * 1024, int(1.5 * footprint_bytes))
    return int(max(16 * 1024 * 1024, min(ceiling, want)))


@functools.partial(
    jax.jit,
    static_argnames=("out_size", "block_b", "out_dtype", "single_buffer_weights"))
def _mlp_forward_impl(x, params, *, out_size, block_b, out_dtype,
                      single_buffer_weights):
    w1, b1, w2, b2, w3, b3 = params
    B, in_size = x.shape
    INp, HIDp = w1.shape
    OUTp = w3.shape[1]
    compute_dtype = w1.dtype

    # Batch padding: sublane granularity first, then the effective batch tile.
    Bp16 = _round_up(max(B, SUBLANES), SUBLANES)
    bb = _round_up(min(block_b, Bp16), SUBLANES)
    Bp = _round_up(Bp16, bb)
    grid = (Bp // bb,)

    xp = _pad2d(x, Bp, INp).astype(compute_dtype)

    # Invariant weights/biases: constant index_map; single-buffer when allowed.
    if single_buffer_weights:
        def full(shape):
            return pl.BlockSpec(shape, lambda i: (0, 0),
                                pipeline_mode=pl.Buffered(1))
    else:
        def full(shape):
            return pl.BlockSpec(shape, lambda i: (0, 0))

    # Rough per-TC VMEM footprint (weights + biases + double-buffered x/out
    # tiles + live intermediates) for the vmem limit derivation.
    wsz = jnp.dtype(compute_dtype).itemsize
    osz = jnp.dtype(out_dtype).itemsize
    wbuf = 1 if single_buffer_weights else 2
    footprint = (
        (INp * HIDp + HIDp * HIDp + HIDp * OUTp) * wsz * wbuf   # weights
        + (2 * HIDp + OUTp) * 4 * wbuf                          # f32 biases
        + 2 * bb * (INp * wsz + OUTp * osz)                     # x/out tiles (2-buf)
        + bb * HIDp * (4 + wsz) + bb * OUTp * 4                 # intermediates
    )

    # Only ask for cross-TC sharding when there is more than one batch tile.
    semantics = ("parallel",) if grid[0] > 1 else ("arbitrary",)

    out = pl.pallas_call(
        _mlp_kernel,
        out_shape=jax.ShapeDtypeStruct((Bp, OUTp), out_dtype),
        grid_spec=pltpu.PrefetchScalarGridSpec(
            num_scalar_prefetch=0,
            grid=grid,
            in_specs=[
                pl.BlockSpec((bb, INp), lambda i: (i, 0)),   # x batch tile
                full((INp, HIDp)),    # w1
                full((1, HIDp)),      # b1
                full((HIDp, HIDp)),   # w2
                full((1, HIDp)),      # b2
                full((HIDp, OUTp)),   # w3
                full((1, OUTp)),      # b3
            ],
            out_specs=pl.BlockSpec((bb, OUTp), lambda i: (i, 0)),
        ),
        compiler_params=pltpu.CompilerParams(
            dimension_semantics=semantics,
            vmem_limit_bytes=_vmem_limit_bytes(footprint),
        ),
    )(xp, w1, b1, w2, b2, w3, b3)

    # Strip batch / lane padding.
    return out[:B, :out_size]


def mlp_forward(x, params, out_size, *, block_b=256, out_dtype=None):
    """x: [B, in_size]; params from prepare_mlp_params(); returns [B, out_size]."""
    if out_dtype is None:
        out_dtype = x.dtype   # pass jnp.bfloat16 to halve output writeback BW
    kwargs = dict(out_size=int(out_size), block_b=int(block_b),
                  out_dtype=jnp.dtype(out_dtype))
    try:
        return _mlp_forward_impl(x, params, single_buffer_weights=True, **kwargs)
    except Exception:
        # pl.Buffered(1) unsupported on this jax/libtpu build -> default buffering.
        return _mlp_forward_impl(x, params, single_buffer_weights=False, **kwargs)


def xavier_normal(key, fan_in, fan_out, dtype=jnp.float32):
    # Matches torch.nn.init.xavier_normal_: std = sqrt(2 / (fan_in + fan_out)).
    # Stored as [fan_in, fan_out] (transpose of PyTorch's [out, in]).
    std = (2.0 / (fan_in + fan_out)) ** 0.5
    return std * jax.random.normal(key, (fan_in, fan_out), dtype=dtype)


def linear_bias(key, fan_in, fan_out, dtype=jnp.float32):
    # nn.Linear default bias init: U(-1/sqrt(fan_in), 1/sqrt(fan_in)).
    bound = 1.0 / (fan_in ** 0.5)
    return jax.random.uniform(key, (1, fan_out), dtype=dtype,
                              minval=-bound, maxval=bound)


def reference_mlp(x, w1, b1, w2, b2, w3, b3, compute_dtype=jnp.bfloat16):
    # Same numerics as the kernel: bf16 operands, f32 accumulation.
    cd = compute_dtype
    h = jnp.dot(x.astype(cd), w1.astype(cd), preferred_element_type=jnp.float32) + b1
    h = jnp.maximum(h, 0.0)
    h = jnp.dot(h.astype(cd), w2.astype(cd), preferred_element_type=jnp.float32) + b2
    h = jnp.maximum(h, 0.0)
    return jnp.dot(h.astype(cd), w3.astype(cd), preferred_element_type=jnp.float32) + b3


if __name__ == "__main__":
    # Small shapes consistent with the module; B=50 exercises the sublane-granular
    # batch-padding path and the 128-lane feature-padding path.
    B, IN, HID, OUT = 50, 32, 64, 16

    key = jax.random.PRNGKey(0)
    kx, k1, k2, k3, kb1, kb2, kb3 = jax.random.split(key, 7)

    x = jax.random.normal(kx, (B, IN), dtype=jnp.float32)

    w1 = xavier_normal(k1, IN, HID)
    b1 = linear_bias(kb1, IN, HID)
    w2 = xavier_normal(k2, HID, HID)
    b2 = linear_bias(kb2, HID, HID)
    w3 = xavier_normal(k3, HID, OUT)
    b3 = linear_bias(kb3, HID, OUT)

    # One-time pad + bf16 cast of the weights (hoisted out of the call path).
    params, (_, _, out_size) = prepare_mlp_params(w1, b1, w2, b2, w3, b3,
                                                  compute_dtype=jnp.bfloat16)

    out = mlp_forward(x, params, out_size, block_b=256)
    out = jax.block_until_ready(out)

    ref = reference_mlp(x, w1, b1, w2, b2, w3, b3, compute_dtype=jnp.bfloat16)

    assert out.shape == (B, OUT), out.shape
    assert jnp.allclose(out, ref, atol=1e-2, rtol=1e-2), float(
        jnp.max(jnp.abs(out - ref)))

    print("KERNEL_OK")
</pallas_src>

<mosaic_0001>
module attributes {stable_mosaic.version = 11 : i64} {
  func.func @_mlp_kernel(%arg0: i32, %arg1: memref<64x128xbf16, #tpu.memory_space<vmem>>, %arg2: memref<128x128xbf16, #tpu.memory_space<vmem>>, %arg3: memref<1x128xf32, #tpu.memory_space<vmem>>, %arg4: memref<128x128xbf16, #tpu.memory_space<vmem>>, %arg5: memref<1x128xf32, #tpu.memory_space<vmem>>, %arg6: memref<128x128xbf16, #tpu.memory_space<vmem>>, %arg7: memref<1x128xf32, #tpu.memory_space<vmem>>, %arg8: memref<64x128xf32, #tpu.memory_space<vmem>>) attributes {dimension_semantics = [#tpu.dimension_semantics<arbitrary>], iteration_bounds = array<i64: 1>, scalar_prefetch = 0 : i64, scratch_operands = 0 : i64, tpu.core_type = #tpu.core_type<tc>, window_params = [{transform_indices = @transform_0, window_bounds = array<i64: 64, 128>}, {pipeline_mode = #tpu.pipeline_mode<synchronous>, transform_indices = @transform_1, window_bounds = array<i64: 128, 128>}, {pipeline_mode = #tpu.pipeline_mode<synchronous>, transform_indices = @transform_2, window_bounds = array<i64: 1, 128>}, {pipeline_mode = #tpu.pipeline_mode<synchronous>, transform_indices = @transform_3, window_bounds = array<i64: 128, 128>}, {pipeline_mode = #tpu.pipeline_mode<synchronous>, transform_indices = @transform_4, window_bounds = array<i64: 1, 128>}, {pipeline_mode = #tpu.pipeline_mode<synchronous>, transform_indices = @transform_5, window_bounds = array<i64: 128, 128>}, {pipeline_mode = #tpu.pipeline_mode<synchronous>, transform_indices = @transform_6, window_bounds = array<i64: 1, 128>}, {transform_indices = @transform_7, window_bounds = array<i64: 64, 128>}]} {
    %c0 = arith.constant 0 : index
    %c0_0 = arith.constant 0 : index
    %0 = vector.load %arg1[%c0, %c0_0] : memref<64x128xbf16, #tpu.memory_space<vmem>>, vector<64x128xbf16>
    %c0_1 = arith.constant 0 : index
    %c0_2 = arith.constant 0 : index
    %1 = vector.load %arg2[%c0_1, %c0_2] : memref<128x128xbf16, #tpu.memory_space<vmem>>, vector<128x128xbf16>
    %cst = arith.constant dense<0.000000e+00> : vector<64x128xf32>
    %2 = tpu.matmul %0, %1, %cst {dimension_numbers = #tpu.dot_dimension_numbers<[1], [0], [0], [1], [0, 0, 1, 1], [], []>} : vector<64x128xbf16>, vector<128x128xbf16>, vector<64x128xf32> -> vector<64x128xf32>
    %c0_3 = arith.constant 0 : index
    %c0_4 = arith.constant 0 : index
    %3 = vector.load %arg3[%c0_3, %c0_4] : memref<1x128xf32, #tpu.memory_space<vmem>>, vector<1x128xf32>
    %4 = vector.broadcast %3 : vector<1x128xf32> to vector<64x128xf32>
    %5 = arith.addf %2, %4 : vector<64x128xf32>
    %cst_5 = arith.constant 0.000000e+00 : f32
    %6 = vector.broadcast %cst_5 : f32 to vector<64x128xf32>
    %7 = arith.maximumf %5, %6 : vector<64x128xf32>
    %8 = arith.truncf %7 : vector<64x128xf32> to vector<64x128xbf16>
    %c0_6 = arith.constant 0 : index
    %c0_7 = arith.constant 0 : index
    %9 = vector.load %arg4[%c0_6, %c0_7] : memref<128x128xbf16, #tpu.memory_space<vmem>>, vector<128x128xbf16>
    %cst_8 = arith.constant dense<0.000000e+00> : vector<64x128xf32>
    %10 = tpu.matmul %8, %9, %cst_8 {dimension_numbers = #tpu.dot_dimension_numbers<[1], [0], [0], [1], [0, 0, 1, 1], [], []>} : vector<64x128xbf16>, vector<128x128xbf16>, vector<64x128xf32> -> vector<64x128xf32>
    %c0_9 = arith.constant 0 : index
    %c0_10 = arith.constant 0 : index
    %11 = vector.load %arg5[%c0_9, %c0_10] : memref<1x128xf32, #tpu.memory_space<vmem>>, vector<1x128xf32>
    %12 = vector.broadcast %11 : vector<1x128xf32> to vector<64x128xf32>
    %13 = arith.addf %10, %12 : vector<64x128xf32>
    %cst_11 = arith.constant 0.000000e+00 : f32
    %14 = vector.broadcast %cst_11 : f32 to vector<64x128xf32>
    %15 = arith.maximumf %13, %14 : vector<64x128xf32>
    %16 = arith.truncf %15 : vector<64x128xf32> to vector<64x128xbf16>
    %c0_12 = arith.constant 0 : index
    %c0_13 = arith.constant 0 : index
    %17 = vector.load %arg6[%c0_12, %c0_13] : memref<128x128xbf16, #tpu.memory_space<vmem>>, vector<128x128xbf16>
    %cst_14 = arith.constant dense<0.000000e+00> : vector<64x128xf32>
    %18 = tpu.matmul %16, %17, %cst_14 {dimension_numbers = #tpu.dot_dimension_numbers<[1], [0], [0], [1], [0, 0, 1, 1], [], []>} : vector<64x128xbf16>, vector<128x128xbf16>, vector<64x128xf32> -> vector<64x128xf32>
    %c0_15 = arith.constant 0 : index
    %c0_16 = arith.constant 0 : index
    %19 = vector.load %arg7[%c0_15, %c0_16] : memref<1x128xf32, #tpu.memory_space<vmem>>, vector<1x128xf32>
    %20 = vector.broadcast %19 : vector<1x128xf32> to vector<64x128xf32>
    %21 = arith.addf %18, %20 : vector<64x128xf32>
    %c0_17 = arith.constant 0 : index
    %c0_18 = arith.constant 0 : index
    %22 = vector.load %arg8[%c0_17, %c0_18] : memref<64x128xf32, #tpu.memory_space<vmem>>, vector<64x128xf32>
    tpu.vector_store %arg8[%c0_17, %c0_18], %21 {strides = array<i32>} : memref<64x128xf32, #tpu.memory_space<vmem>>, vector<64x128xf32>,
    return
  }
  func.func @transform_0(%arg0: i32) -> (i32, i32) {
    %c0_i32 = arith.constant 0 : i32
    %c0_i32_0 = arith.constant 0 : i32
    return %arg0, %c0_i32 : i32, i32
  }
  func.func @transform_1(%arg0: i32) -> (i32, i32) {
    %c0_i32 = arith.constant 0 : i32
    %c0_i32_0 = arith.constant 0 : i32
    %c0_i32_1 = arith.constant 0 : i32
    return %c0_i32, %c0_i32_0 : i32, i32
  }
  func.func @transform_2(%arg0: i32) -> (i32, i32) {
    %c0_i32 = arith.constant 0 : i32
    %c0_i32_0 = arith.constant 0 : i32
    %c0_i32_1 = arith.constant 0 : i32
    return %c0_i32, %c0_i32_0 : i32, i32
  }
  func.func @transform_3(%arg0: i32) -> (i32, i32) {
    %c0_i32 = arith.constant 0 : i32
    %c0_i32_0 = arith.constant 0 : i32
    %c0_i32_1 = arith.constant 0 : i32
    return %c0_i32, %c0_i32_0 : i32, i32
  }
  func.func @transform_4(%arg0: i32) -> (i32, i32) {
    %c0_i32 = arith.constant 0 : i32
    %c0_i32_0 = arith.constant 0 : i32
    %c0_i32_1 = arith.constant 0 : i32
    return %c0_i32, %c0_i32_0 : i32, i32
  }
  func.func @transform_5(%arg0: i32) -> (i32, i32) {
    %c0_i32 = arith.constant 0 : i32
    %c0_i32_0 = arith.constant 0 : i32
    %c0_i32_1 = arith.constant 0 : i32
    return %c0_i32, %c0_i32_0 : i32, i32
  }
  func.func @transform_6(%arg0: i32) -> (i32, i32) {
    %c0_i32 = arith.constant 0 : i32
    %c0_i32_0 = arith.constant 0 : i32
    %c0_i32_1 = arith.constant 0 : i32
    return %c0_i32, %c0_i32_0 : i32, i32
  }
  func.func @transform_7(%arg0: i32) -> (i32, i32) {
    %c0_i32 = arith.constant 0 : i32
    %c0_i32_0 = arith.constant 0 : i32
    return %arg0, %c0_i32 : i32, i32
  }
}

module attributes {stable_mosaic.version = 11 : i64} {
  func.func @_mlp_kernel(%arg0: i32, %arg1: memref<64x128xbf16, #tpu.memory_space<vmem>>, %arg2: memref<128x128xbf16, #tpu.memory_space<vmem>>, %arg3: memref<1x128xf32, #tpu.memory_space<vmem>>, %arg4: memref<128x128xbf16, #tpu.memory_space<vmem>>, %arg5: memref<1x128xf32, #tpu.memory_space<vmem>>, %arg6: memref<128x128xbf16, #tpu.memory_space<vmem>>, %arg7: memref<1x128xf32, #tpu.memory_space<vmem>>, %arg8: memref<64x128xf32, #tpu.memory_space<vmem>>) attributes {dimension_semantics = [#tpu.dimension_semantics<arbitrary>], iteration_bounds = array<i64: 1>, scalar_prefetch = 0 : i64, scratch_operands = 0 : i64, tpu.core_type = #tpu.core_type<tc>, window_params = [{transform_indices = @transform_0, window_bounds = array<i64: 64, 128>}, {pipeline_mode = #tpu.pipeline_mode<synchronous>, transform_indices = @transform_1, window_bounds = array<i64: 128, 128>}, {pipeline_mode = #tpu.pipeline_mode<synchronous>, transform_indices = @transform_2, window_bounds = array<i64: 1, 128>}, {pipeline_mode = #tpu.pipeline_mode<synchronous>, transform_indices = @transform_3, window_bounds = array<i64: 128, 128>}, {pipeline_mode = #tpu.pipeline_mode<synchronous>, transform_indices = @transform_4, window_bounds = array<i64: 1, 128>}, {pipeline_mode = #tpu.pipeline_mode<synchronous>, transform_indices = @transform_5, window_bounds = array<i64: 128, 128>}, {pipeline_mode = #tpu.pipeline_mode<synchronous>, transform_indices = @transform_6, window_bounds = array<i64: 1, 128>}, {transform_indices = @transform_7, window_bounds = array<i64: 64, 128>}]} {
    %c0 = arith.constant 0 : index
    %c0_0 = arith.constant 0 : index
    %0 = vector.load %arg1[%c0, %c0_0] : memref<64x128xbf16, #tpu.memory_space<vmem>>, vector<64x128xbf16>
    %c0_1 = arith.constant 0 : index
    %c0_2 = arith.constant 0 : index
    %1 = vector.load %arg2[%c0_1, %c0_2] : memref<128x128xbf16, #tpu.memory_space<vmem>>, vector<128x128xbf16>
    %cst = arith.constant dense<0.000000e+00> : vector<64x128xf32>
    %2 = tpu.matmul %0, %1, %cst {dimension_numbers = #tpu.dot_dimension_numbers<[1], [0], [0], [1], [0, 0, 1, 1], [], []>} : vector<64x128xbf16>, vector<128x128xbf16>, vector<64x128xf32> -> vector<64x128xf32>
    %c0_3 = arith.constant 0 : index
    %c0_4 = arith.constant 0 : index
    %3 = vector.load %arg3[%c0_3, %c0_4] : memref<1x128xf32, #tpu.memory_space<vmem>>, vector<1x128xf32>
    %4 = vector.broadcast %3 : vector<1x128xf32> to vector<64x128xf32>
    %5 = arith.addf %2, %4 : vector<64x128xf32>
    %cst_5 = arith.constant 0.000000e+00 : f32
    %6 = vector.broadcast %cst_5 : f32 to vector<64x128xf32>
    %7 = arith.maximumf %5, %6 : vector<64x128xf32>
    %8 = arith.truncf %7 : vector<64x128xf32> to vector<64x128xbf16>
    %c0_6 = arith.constant 0 : index
    %c0_7 = arith.constant 0 : index
    %9 = vector.load %arg4[%c0_6, %c0_7] : memref<128x128xbf16, #tpu.memory_space<vmem>>, vector<128x128xbf16>
    %cst_8 = arith.constant dense<0.000000e+00> : vector<64x128xf32>
    %10 = tpu.matmul %8, %9, %cst_8 {dimension_numbers = #tpu.dot_dimension_numbers<[1], [0], [0], [1], [0, 0, 1, 1], [], []>} : vector<64x128xbf16>, vector<128x128xbf16>, vector<64x128xf32> -> vector<64x128xf32>
    %c0_9 = arith.constant 0 : index
    %c0_10 = arith.constant 0 : index
    %11 = vector.load %arg5[%c0_9, %c0_10] : memref<1x128xf32, #tpu.memory_space<vmem>>, vector<1x128xf32>
    %12 = vector.broadcast %11 : vector<1x128xf32> to vector<64x128xf32>
    %13 = arith.addf %10, %12 : vector<64x128xf32>
    %cst_11 = arith.constant 0.000000e+00 : f32
    %14 = vector.broadcast %cst_11 : f32 to vector<64x128xf32>
    %15 = arith.maximumf %13, %14 : vector<64x128xf32>
    %16 = arith.truncf %15 : vector<64x128xf32> to vector<64x128xbf16>
    %c0_12 = arith.constant 0 : index
    %c0_13 = arith.constant 0 : index
    %17 = vector.load %arg6[%c0_12, %c0_13] : memref<128x128xbf16, #tpu.memory_space<vmem>>, vector<128x128xbf16>
    %cst_14 = arith.constant dense<0.000000e+00> : vector<64x128xf32>
    %18 = tpu.matmul %16, %17, %cst_14 {dimension_numbers = #tpu.dot_dimension_numbers<[1], [0], [0], [1], [0, 0, 1, 1], [], []>} : vector<64x128xbf16>, vector<128x128xbf16>, vector<64x128xf32> -> vector<64x128xf32>
    %c0_15 = arith.constant 0 : index
    %c0_16 = arith.constant 0 : index
    %19 = vector.load %arg7[%c0_15, %c0_16] : memref<1x128xf32, #tpu.memory_space<vmem>>, vector<1x128xf32>
    %20 = vector.broadcast %19 : vector<1x128xf32> to vector<64x128xf32>
    %21 = arith.addf %18, %20 : vector<64x128xf32>
    %c0_17 = arith.constant 0 : index
    %c0_18 = arith.constant 0 : index
    %22 = vector.load %arg8[%c0_17, %c0_18] : memref<64x128xf32, #tpu.memory_space<vmem>>, vector<64x128xf32>
    tpu.vector_store %arg8[%c0_17, %c0_18], %21 {strides = array<i32>} : memref<64x128xf32, #tpu.memory_space<vmem>>, vector<64x128xf32>,
    return
  }
  func.func @transform_0(%arg0: i32) -> (i32, i32) {
    %c0_i32 = arith.constant 0 : i32
    %c0_i32_0 = arith.constant 0 : i32
    return %arg0, %c0_i32 : i32, i32
  }
  func.func @transform_1(%arg0: i32) -> (i32, i32) {
    %c0_i32 = arith.constant 0 : i32
    %c0_i32_0 = arith.constant 0 : i32
    %c0_i32_1 = arith.constant 0 : i32
    return %c0_i32, %c0_i32_0 : i32, i32
  }
  func.func @transform_2(%arg0: i32) -> (i32, i32) {
    %c0_i32 = arith.constant 0 : i32
    %c0_i32_0 = arith.constant 0 : i32
    %c0_i32_1 = arith.constant 0 : i32
    return %c0_i32, %c0_i32_0 : i32, i32
  }
  func.func @transform_3(%arg0: i32) -> (i32, i32) {
    %c0_i32 = arith.constant 0 : i32
    %c0_i32_0 = arith.constant 0 : i32
    %c0_i32_1 = arith.constant 0 : i32
    return %c0_i32, %c0_i32_0 : i32, i32
  }
  func.func @transform_4(%arg0: i32) -> (i32, i32) {
    %c0_i32 = arith.constant 0 : i32
    %c0_i32_0 = arith.constant 0 : i32
    %c0_i32_1 = arith.constant 0 : i32
    return %c0_i32, %c0_i32_0 : i32, i32
  }
  func.func @transform_5(%arg0: i32) -> (i32, i32) {
    %c0_i32 = arith.constant 0 : i32
    %c0_i32_0 = arith.constant 0 : i32
    %c0_i32_1 = arith.constant 0 : i32
    return %c0_i32, %c0_i32_0 : i32, i32
  }
  func.func @transform_6(%arg0: i32) -> (i32, i32) {
    %c0_i32 = arith.constant 0 : i32
    %c0_i32_0 = arith.constant 0 : i32
    %c0_i32_1 = arith.constant 0 : i32
    return %c0_i32, %c0_i32_0 : i32, i32
  }
  func.func @transform_7(%arg0: i32) -> (i32, i32) {
    %c0_i32 = arith.constant 0 : i32
    %c0_i32_0 = arith.constant 0 : i32
    return %arg0, %c0_i32 : i32, i32
  }
}

</mosaic_0001>

<llo_original>
// kernel: _mlp_forward_impl.1
$region0: #{_mlp_forward_impl.1}
  #allocation0 [shape = 'u32[]', space=smem, size = 0x4, offset = 0x4, fixed_abs, tag = 'smem constant byte address 0x4 - core index']
  #allocation1 [shape = 'u32[144,128]{1,0:T(1,128)}', space=vmem, size = 0x12000, scoped, tag = 'internal scratch']
  %s0 = inlined_call_operand.vmem [shape: bf16[64,128], index: 0, kind: input, shape index: {}]
  %s1 = inlined_call_operand.vmem [shape: bf16[128,128], index: 1, kind: input, shape index: {}]
  %s2 = inlined_call_operand.vmem [shape: f32[1,128], index: 2, kind: input, shape index: {}]
  %s3 = inlined_call_operand.vmem [shape: bf16[128,128], index: 3, kind: input, shape index: {}]
  %s4 = inlined_call_operand.vmem [shape: f32[1,128], index: 4, kind: input, shape index: {}]
  %s5 = inlined_call_operand.hbm [shape: bf16[128,128], index: 5, kind: input, shape index: {}]
  %s6 = inlined_call_operand.vmem [shape: f32[1,128], index: 6, kind: input, shape index: {}]
  %s7 = inlined_call_operand.vmem [shape: f32[64,128], index: 7, kind: output, shape index: {}]
  %s8 = sld [smem:[#allocation0]]
  $region42: #{_mlp_forward_impl.1} parent=0
    _
  %s10 = ssub.s32 1, %s8
  %s11 = scalar_select 0, %s10, %s8
  $region1: #{_mlp_forward_impl.1} parent=0
    #allocation2 [shape = 'u8[32768]{0}', space=vmem, size = 0x8000, scoped, tag = 'input window, operand 5, single buffered']
    #allocation3 [shape = 's32[1]{0}', space=sflag, size = 0x4, scoped, tag = 'scoped memory for _mlp_forward_impl.1']
    %12 = vsyncpa [#allocation3], 0
    // Predicated region
    $region2: #{_mlp_forward_impl.1} parent=1 // pred_check
      _
    $region3: #{_mlp_forward_impl.1} parent=1 // pred_check_branch
      %14 = sbr.rel (0) target = $region5
    $region4: #{_mlp_forward_impl.1} parent=1 // pred_region
      _
    $region5: #{_mlp_forward_impl.1} parent=1 // pred_fallthru
      _
    // Predicated region
    $region6: #{_mlp_forward_impl.1} parent=1 // pred_check
      _
    $region7: #{_mlp_forward_impl.1} parent=1 // pred_check_branch
      %16 = sbr.rel (0) target = $region9
    $region8: #{_mlp_forward_impl.1} parent=1 // pred_region
      _
    $region9: #{_mlp_forward_impl.1} parent=1 // pred_fallthru
      _
    // Predicated region
    $region10: #{_mlp_forward_impl.1} parent=1 // pred_check
      _
    $region11: #{_mlp_forward_impl.1} parent=1 // pred_check_branch
      %18 = sbr.rel (0) target = $region13
    $region12: #{_mlp_forward_impl.1} parent=1 // pred_region
      _
    $region13: #{_mlp_forward_impl.1} parent=1 // pred_fallthru
      _
    // Predicated region
    $region14: #{_mlp_forward_impl.1} parent=1 // pred_check
      _
    $region15: #{_mlp_forward_impl.1} parent=1 // pred_check_branch
      %20 = sbr.rel (0) target = $region17
    $region16: #{_mlp_forward_impl.1} parent=1 // pred_region
      _
    $region17: #{_mlp_forward_impl.1} parent=1 // pred_fallthru
      _
    // Predicated region
    $region18: #{_mlp_forward_impl.1} parent=1 // pred_check
      _
    $region19: #{_mlp_forward_impl.1} parent=1 // pred_check_branch
      %22 = sbr.rel (0) target = $region21
    $region20: #{_mlp_forward_impl.1} parent=1 // pred_region
      _
    $region21: #{_mlp_forward_impl.1} parent=1 // pred_fallthru
      _
    // Predicated region
    $region22: #{_mlp_forward_impl.1} parent=1 // pred_check
      _
    $region23: #{_mlp_forward_impl.1} parent=1 // pred_check_branch
      %24 = sbr.rel (0) target = $region25
    $region24: #{_mlp_forward_impl.1} parent=1 // pred_region
      %s26 = ssub.s32 1024, 1024
      %27 = vsyncadd [#allocation3], %s26
      %s28 = sshll.u32 [#allocation2], 4
      %s29 = int_to_ptr.vmem [resolvable:$true] %s28
      %34 = dma.hbm_to_vmem [thread:$0]  %s5, 1024, %s29, [#allocation3], 64, 64, 4
    $region25: #{_mlp_forward_impl.1} parent=1 // pred_fallthru
      _
    // Predicated region
    $region26: #{_mlp_forward_impl.1} parent=1 // pred_check
      _
    $region27: #{_mlp_forward_impl.1} parent=1 // pred_check_branch
      %36 = sbr.rel (0) target = $region29
    $region28: #{_mlp_forward_impl.1} parent=1 // pred_region
      _
    $region29: #{_mlp_forward_impl.1} parent=1 // pred_fallthru
      _
    // Predicated region
    $region30: #{_mlp_forward_impl.1} parent=1 // pred_check
      _
    $region31: #{_mlp_forward_impl.1} parent=1 // pred_check_branch
      %38 = sbr.rel (0) target = $region33
    $region32: #{_mlp_forward_impl.1} parent=1 // pred_region
      %39 = dma.done [#allocation3], 1024
    $region33: #{_mlp_forward_impl.1} parent=1 // pred_fallthru
      _
    %v41 = vld [vmem:[%s0] sm:$0xf]
    %v42 = vld [vmem:[%s0 + $0x4] sm:$0xf]
    %v43 = vld [vmem:[%s0 + $0x8] sm:$0xf]
    %v44 = vld [vmem:[%s0 + $0xc] sm:$0xf]
    %v45 = vld [vmem:[%s0 + $0x10] sm:$0xf]
    %v46 = vld [vmem:[%s0 + $0x14] sm:$0xf]
    %v47 = vld [vmem:[%s0 + $0x18] sm:$0xf]
    %v48 = vld [vmem:[%s0 + $0x1c] sm:$0xf]
    %v49 = vld [vmem:[%s1] sm:$0xf]
    %v50 = vld [vmem:[%s1 + $0x4] sm:$0xf]
    %v51 = vld [vmem:[%s1 + $0x8] sm:$0xf]
    %v52 = vld [vmem:[%s1 + $0xc] sm:$0xf]
    %v53 = vld [vmem:[%s1 + $0x10] sm:$0xf]
    %v54 = vld [vmem:[%s1 + $0x14] sm:$0xf]
    %v55 = vld [vmem:[%s1 + $0x18] sm:$0xf]
    %v56 = vld [vmem:[%s1 + $0x1c] sm:$0xf]
    %v57 = vld [vmem:[%s1 + $0x20] sm:$0xf]
    %v58 = vld [vmem:[%s1 + $0x24] sm:$0xf]
    %v59 = vld [vmem:[%s1 + $0x28] sm:$0xf]
    %v60 = vld [vmem:[%s1 + $0x2c] sm:$0xf]
    %v61 = vld [vmem:[%s1 + $0x30] sm:$0xf]
    %v62 = vld [vmem:[%s1 + $0x34] sm:$0xf]
    %v63 = vld [vmem:[%s1 + $0x38] sm:$0xf]
    %v64 = vld [vmem:[%s1 + $0x3c] sm:$0xf]
    %v65 = vld [vmem:[%s2] sm:$0x1]
    %v67 = vlaneseq
    %v68 = vshrl.u32 %v67, 7
    %v69 = vsub.s32 0, %v68
    %v70 = vrot.slane %v65, %v69
    %v80 = vunpack.c.l.b16 %v41
    %v81 = vunpack.c.l.b16 %v42
    %v82 = vunpack.c.l.b16 %v43
    %v83 = vunpack.c.l.b16 %v44
    %v84 = vunpack.c.l.b16 %v45
    %v85 = vunpack.c.l.b16 %v46
    %v86 = vunpack.c.l.b16 %v47
    %v87 = vunpack.c.l.b16 %v48
    %v88 = vpack.c.b16 %v81, %v80
    %v89 = vpack.c.b16 %v83, %v82
    %v90 = vpack.c.b16 %v85, %v84
    %v91 = vpack.c.b16 %v87, %v86
    %v112 = vunpack.c.l.b16 %v49
    %v113 = vunpack.c.l.b16 %v50
    %v114 = vunpack.c.l.b16 %v51
    %v115 = vunpack.c.l.b16 %v52
    %v116 = vunpack.c.l.b16 %v53
    %v117 = vunpack.c.l.b16 %v54
    %v118 = vunpack.c.l.b16 %v55
    %v119 = vunpack.c.l.b16 %v56
    %v120 = vunpack.c.l.b16 %v57
    %v121 = vunpack.c.l.b16 %v58
    %v122 = vunpack.c.l.b16 %v59
    %v123 = vunpack.c.l.b16 %v60
    %v124 = vunpack.c.l.b16 %v61
    %v125 = vunpack.c.l.b16 %v62
    %v126 = vunpack.c.l.b16 %v63
    %v127 = vunpack.c.l.b16 %v64
    %v128 = vpack.c.b16 %v113, %v112
    %v129 = vpack.c.b16 %v115, %v114
    %v130 = vpack.c.b16 %v117, %v116
    %v131 = vpack.c.b16 %v119, %v118
    %v132 = vpack.c.b16 %v121, %v120
    %v133 = vpack.c.b16 %v123, %v122
    %v134 = vpack.c.b16 %v125, %v124
    %v135 = vpack.c.b16 %v127, %v126
    %144 = vmatprep.subr.bf16.mxu0 0
    %145 = vmatpush1.bf16.msra.mxu0 %v128
    %146 = vmatprep.subr.bf16.mxu0 0
    %147 = vmatpush1.bf16.msra.mxu0 %v129
    %148 = vmatprep.subr.bf16.mxu0 0
    %149 = vmatpush1.bf16.msra.mxu0 %v130
    %150 = vmatprep.subr.bf16.mxu0 0
    %151 = vmatpush1.bf16.msra.mxu0 %v131
    %152 = vmatprep.subr.bf16.mxu0 0
    %153 = vmatpush1.bf16.msra.mxu0 %v132
    %154 = vmatprep.subr.bf16.mxu0 0
    %155 = vmatpush1.bf16.msra.mxu0 %v133
    %156 = vmatprep.subr.bf16.mxu0 0
    %157 = vmatpush1.bf16.msra.mxu0 %v134
    %158 = vmatprep.subr.bf16.mxu0 0
    %159 = vmatpush1.bf16.msra.mxu0 %v135
    %160 = vmatprep.subr.bf16.mxu0 0
    %161 = vmatpush1.bf16.msra.mxu0 0
    %162 = vmatprep.subr.bf16.mxu0 0
    %163 = vmatpush1.bf16.msra.mxu0 0
    %164 = vmatprep.subr.bf16.mxu0 0
    %165 = vmatpush1.bf16.msra.mxu0 0
    %166 = vmatprep.subr.bf16.mxu0 0
    %167 = vmatpush1.bf16.msra.mxu0 0
    %168 = vmatprep.subr.bf16.mxu0 0
    %169 = vmatpush1.bf16.msra.mxu0 0
    %170 = vmatprep.subr.bf16.mxu0 0
    %171 = vmatpush1.bf16.msra.mxu0 0
    %172 = vmatprep.subr.bf16.mxu0 0
    %173 = vmatpush1.bf16.msra.mxu0 0
    %174 = vmatprep.subr.bf16.mxu0 0
    %175 = vmatpush1.bf16.msra.mxu0 0
    %176 = vmatprep.mubr.bf16.mxu0 0
    %177 = vmatmul.mubr.bf16.gmra.mrb[0].mxu0 %v88
    %v178 = vpop.f32.mrb[0].mxu0
    %v179 = vadd.f32 %v70, %v178
    %v180 = vpop.f32.mrb[0].mxu0
    %v181 = vpop.f32.mrb[0].mxu0
    %v182 = vadd.f32 %v70, %v181
    %v183 = vpop.f32.mrb[0].mxu0
    %184 = vmatprep.mubr.bf16.mxu0 0
    %185 = vmatmul.mubr.bf16.gmra.mrb[0].mxu0 %v89
    %v186 = vpop.f32.mrb[0].mxu0
    %v187 = vadd.f32 %v70, %v186
    %v188 = vpop.f32.mrb[0].mxu0
    %v189 = vpop.f32.mrb[0].mxu0
    %v190 = vadd.f32 %v70, %v189
    %v191 = vpop.f32.mrb[0].mxu0
    %192 = vmatprep.mubr.bf16.mxu0 0
    %193 = vmatmul.mubr.bf16.gmra.mrb[0].mxu0 %v90
    %v194 = vpop.f32.mrb[0].mxu0
    %v195 = vadd.f32 %v70, %v194
    %v196 = vpop.f32.mrb[0].mxu0
    %v197 = vpop.f32.mrb[0].mxu0
    %v198 = vadd.f32 %v70, %v197
    %v199 = vpop.f32.mrb[0].mxu0
    %200 = vmatprep.mubr.bf16.mxu0 0
    %201 = vmatmul.mubr.bf16.gmra.mrb[0].mxu0 %v91
    %v202 = vpop.f32.mrb[0].mxu0
    %v203 = vadd.f32 %v70, %v202
    %v204 = vpop.f32.mrb[0].mxu0
    %v205 = vpop.f32.mrb[0].mxu0
    %v206 = vadd.f32 %v70, %v205
    %v207 = vpop.f32.mrb[0].mxu0
    %208 = vdwg.mxu0
    %v209 = vmax.f32 %v179, 0.0
    %v210 = vmax.f32 %v182, 0.0
    %v211 = vmax.f32 %v187, 0.0
    %v212 = vmax.f32 %v190, 0.0
    %v213 = vmax.f32 %v195, 0.0
    %v214 = vmax.f32 %v198, 0.0
    %v215 = vmax.f32 %v203, 0.0
    %v216 = vmax.f32 %v206, 0.0
    %v217 = vpack.c.bf16 %v210, %v209
    %v218 = vpack.c.bf16 %v212, %v211
    %v219 = vpack.c.bf16 %v214, %v213
    %v220 = vpack.c.bf16 %v216, %v215
    %v221 = vld [vmem:[%s3] sm:$0xf]
    %v222 = vld [vmem:[%s3 + $0x4] sm:$0xf]
    %v223 = vld [vmem:[%s3 + $0x8] sm:$0xf]
    %v224 = vld [vmem:[%s3 + $0xc] sm:$0xf]
    %v225 = vld [vmem:[%s3 + $0x10] sm:$0xf]
    %v226 = vld [vmem:[%s3 + $0x14] sm:$0xf]
    %v227 = vld [vmem:[%s3 + $0x18] sm:$0xf]
    %v228 = vld [vmem:[%s3 + $0x1c] sm:$0xf]
    %v229 = vld [vmem:[%s3 + $0x20] sm:$0xf]
    %v230 = vld [vmem:[%s3 + $0x24] sm:$0xf]
    %v231 = vld [vmem:[%s3 + $0x28] sm:$0xf]
    %v232 = vld [vmem:[%s3 + $0x2c] sm:$0xf]
    %v233 = vld [vmem:[%s3 + $0x30] sm:$0xf]
    %v234 = vld [vmem:[%s3 + $0x34] sm:$0xf]
    %v235 = vld [vmem:[%s3 + $0x38] sm:$0xf]
    %v236 = vld [vmem:[%s3 + $0x3c] sm:$0xf]
    %v237 = vld [vmem:[%s4] sm:$0x1]
    %v239 = vlaneseq
    %v240 = vshrl.u32 %v239, 7
    %v241 = vsub.s32 0, %v240
    %v242 = vrot.slane %v237, %v241
    %v260 = vunpack.c.l.b16 %v221
    %v261 = vunpack.c.l.b16 %v222
    %v262 = vunpack.c.l.b16 %v223
    %v263 = vunpack.c.l.b16 %v224
    %v264 = vunpack.c.l.b16 %v225
    %v265 = vunpack.c.l.b16 %v226
    %v266 = vunpack.c.l.b16 %v227
    %v267 = vunpack.c.l.b16 %v228
    %v268 = vunpack.c.l.b16 %v229
    %v269 = vunpack.c.l.b16 %v230
    %v270 = vunpack.c.l.b16 %v231
    %v271 = vunpack.c.l.b16 %v232
    %v272 = vunpack.c.l.b16 %v233
    %v273 = vunpack.c.l.b16 %v234
    %v274 = vunpack.c.l.b16 %v235
    %v275 = vunpack.c.l.b16 %v236
    %v276 = vpack.c.b16 %v261, %v260
    %v277 = vpack.c.b16 %v263, %v262
    %v278 = vpack.c.b16 %v265, %v264
    %v279 = vpack.c.b16 %v267, %v266
    %v280 = vpack.c.b16 %v269, %v268
    %v281 = vpack.c.b16 %v271, %v270
    %v282 = vpack.c.b16 %v273, %v272
    %v283 = vpack.c.b16 %v275, %v274
    %292 = vmatprep.subr.bf16.mxu0 0
    %293 = vmatpush1.bf16.msra.mxu0 %v276
    %294 = vmatprep.subr.bf16.mxu0 0
    %295 = vmatpush1.bf16.msra.mxu0 %v277
    %296 = vmatprep.subr.bf16.mxu0 0
    %297 = vmatpush1.bf16.msra.mxu0 %v278
    %298 = vmatprep.subr.bf16.mxu0 0
    %299 = vmatpush1.bf16.msra.mxu0 %v279
    %300 = vmatprep.subr.bf16.mxu0 0
    %301 = vmatpush1.bf16.msra.mxu0 %v280
    %302 = vmatprep.subr.bf16.mxu0 0
    %303 = vmatpush1.bf16.msra.mxu0 %v281
    %304 = vmatprep.subr.bf16.mxu0 0
    %305 = vmatpush1.bf16.msra.mxu0 %v282
    %306 = vmatprep.subr.bf16.mxu0 0
    %307 = vmatpush1.bf16.msra.mxu0 %v283
    %308 = vmatprep.subr.bf16.mxu0 0
    %309 = vmatpush1.bf16.msra.mxu0 0
    %310 = vmatprep.subr.bf16.mxu0 0
    %311 = vmatpush1.bf16.msra.mxu0 0
    %312 = vmatprep.subr.bf16.mxu0 0
    %313 = vmatpush1.bf16.msra.mxu0 0
    %314 = vmatprep.subr.bf16.mxu0 0
    %315 = vmatpush1.bf16.msra.mxu0 0
    %316 = vmatprep.subr.bf16.mxu0 0
    %317 = vmatpush1.bf16.msra.mxu0 0
    %318 = vmatprep.subr.bf16.mxu0 0
    %319 = vmatpush1.bf16.msra.mxu0 0
    %320 = vmatprep.subr.bf16.mxu0 0
    %321 = vmatpush1.bf16.msra.mxu0 0
    %322 = vmatprep.subr.bf16.mxu0 0
    %323 = vmatpush1.bf16.msra.mxu0 0
    %324 = vmatprep.mubr.bf16.mxu0 0
    %325 = vmatmul.mubr.bf16.gmra.mrb[0].mxu0 %v217
    %v326 = vpop.f32.mrb[0].mxu0
    %v327 = vadd.f32 %v242, %v326
    %v328 = vpop.f32.mrb[0].mxu0
    %v329 = vpop.f32.mrb[0].mxu0
    %v330 = vadd.f32 %v242, %v329
    %v331 = vpop.f32.mrb[0].mxu0
    %332 = vmatprep.mubr.bf16.mxu0 0
    %333 = vmatmul.mubr.bf16.gmra.mrb[0].mxu0 %v218
    %v334 = vpop.f32.mrb[0].mxu0
    %v335 = vadd.f32 %v242, %v334
    %v336 = vpop.f32.mrb[0].mxu0
    %v337 = vpop.f32.mrb[0].mxu0
    %v338 = vadd.f32 %v242, %v337
    %v339 = vpop.f32.mrb[0].mxu0
    %340 = vmatprep.mubr.bf16.mxu0 0
    %341 = vmatmul.mubr.bf16.gmra.mrb[0].mxu0 %v219
    %v342 = vpop.f32.mrb[0].mxu0
    %v343 = vadd.f32 %v242, %v342
    %v344 = vpop.f32.mrb[0].mxu0
    %v345 = vpop.f32.mrb[0].mxu0
    %v346 = vadd.f32 %v242, %v345
    %v347 = vpop.f32.mrb[0].mxu0
    %348 = vmatprep.mubr.bf16.mxu0 0
    %349 = vmatmul.mubr.bf16.gmra.mrb[0].mxu0 %v220
    %v350 = vpop.f32.mrb[0].mxu0
    %v351 = vadd.f32 %v242, %v350
    %v352 = vpop.f32.mrb[0].mxu0
    %v353 = vpop.f32.mrb[0].mxu0
    %v354 = vadd.f32 %v242, %v353
    %v355 = vpop.f32.mrb[0].mxu0
    %356 = vdwg.mxu0
    %v357 = vmax.f32 %v327, 0.0
    %v358 = vmax.f32 %v330, 0.0
    %v359 = vmax.f32 %v335, 0.0
    %v360 = vmax.f32 %v338, 0.0
    %v361 = vmax.f32 %v343, 0.0
    %v362 = vmax.f32 %v346, 0.0
    %v363 = vmax.f32 %v351, 0.0
    %v364 = vmax.f32 %v354, 0.0
    %v365 = vpack.c.bf16 %v358, %v357
    %v366 = vpack.c.bf16 %v360, %v359
    %v367 = vpack.c.bf16 %v362, %v361
    %v368 = vpack.c.bf16 %v364, %v363
    %v369 = vld [vmem:[#allocation2] sm:$0xf]
    %v370 = vld [vmem:[#allocation2 + $0x4] sm:$0xf]
    %v371 = vld [vmem:[#allocation2 + $0x8] sm:$0xf]
    %v372 = vld [vmem:[#allocation2 + $0xc] sm:$0xf]
    %v373 = vld [vmem:[#allocation2 + $0x10] sm:$0xf]
    %v374 = vld [vmem:[#allocation2 + $0x14] sm:$0xf]
    %v375 = vld [vmem:[#allocation2 + $0x18] sm:$0xf]
    %v376 = vld [vmem:[#allocation2 + $0x1c] sm:$0xf]
    %v377 = vld [vmem:[#allocation2 + $0x20] sm:$0xf]
    %v378 = vld [vmem:[#allocation2 + $0x24] sm:$0xf]
    %v379 = vld [vmem:[#allocation2 + $0x28] sm:$0xf]
    %v380 = vld [vmem:[#allocation2 + $0x2c] sm:$0xf]
    %v381 = vld [vmem:[#allocation2 + $0x30] sm:$0xf]
    %v382 = vld [vmem:[#allocation2 + $0x34] sm:$0xf]
    %v383 = vld [vmem:[#allocation2 + $0x38] sm:$0xf]
    %v384 = vld [vmem:[#allocation2 + $0x3c] sm:$0xf]
    %v385 = vld [vmem:[%s6] sm:$0x1]
    %v387 = vlaneseq
    %v388 = vshrl.u32 %v387, 7
    %v389 = vsub.s32 0, %v388
    %v390 = vrot.slane %v385, %v389
    %v408 = vunpack.c.l.b16 %v369
    %v409 = vunpack.c.l.b16 %v370
    %v410 = vunpack.c.l.b16 %v371
    %v411 = vunpack.c.l.b16 %v372
    %v412 = vunpack.c.l.b16 %v373
    %v413 = vunpack.c.l.b16 %v374
    %v414 = vunpack.c.l.b16 %v375
    %v415 = vunpack.c.l.b16 %v376
    %v416 = vunpack.c.l.b16 %v377
    %v417 = vunpack.c.l.b16 %v378
    %v418 = vunpack.c.l.b16 %v379
    %v419 = vunpack.c.l.b16 %v380
    %v420 = vunpack.c.l.b16 %v381
    %v421 = vunpack.c.l.b16 %v382
    %v422 = vunpack.c.l.b16 %v383
    %v423 = vunpack.c.l.b16 %v384
    %v424 = vpack.c.b16 %v409, %v408
    %v425 = vpack.c.b16 %v411, %v410
    %v426 = vpack.c.b16 %v413, %v412
    %v427 = vpack.c.b16 %v415, %v414
    %v428 = vpack.c.b16 %v417, %v416
    %v429 = vpack.c.b16 %v419, %v418
    %v430 = vpack.c.b16 %v421, %v420
    %v431 = vpack.c.b16 %v423, %v422
    %440 = vmatprep.subr.bf16.mxu0 0
    %441 = vmatpush1.bf16.msra.mxu0 %v424
    %442 = vmatprep.subr.bf16.mxu0 0
    %443 = vmatpush1.bf16.msra.mxu0 %v425
    %444 = vmatprep.subr.bf16.mxu0 0
    %445 = vmatpush1.bf16.msra.mxu0 %v426
    %446 = vmatprep.subr.bf16.mxu0 0
    %447 = vmatpush1.bf16.msra.mxu0 %v427
    %448 = vmatprep.subr.bf16.mxu0 0
    %449 = vmatpush1.bf16.msra.mxu0 %v428
    %450 = vmatprep.subr.bf16.mxu0 0
    %451 = vmatpush1.bf16.msra.mxu0 %v429
    %452 = vmatprep.subr.bf16.mxu0 0
    %453 = vmatpush1.bf16.msra.mxu0 %v430
    %454 = vmatprep.subr.bf16.mxu0 0
    %455 = vmatpush1.bf16.msra.mxu0 %v431
    %456 = vmatprep.subr.bf16.mxu0 0
    %457 = vmatpush1.bf16.msra.mxu0 0
    %458 = vmatprep.subr.bf16.mxu0 0
    %459 = vmatpush1.bf16.msra.mxu0 0
    %460 = vmatprep.subr.bf16.mxu0 0
    %461 = vmatpush1.bf16.msra.mxu0 0
    %462 = vmatprep.subr.bf16.mxu0 0
    %463 = vmatpush1.bf16.msra.mxu0 0
    %464 = vmatprep.subr.bf16.mxu0 0
    %465 = vmatpush1.bf16.msra.mxu0 0
    %466 = vmatprep.subr.bf16.mxu0 0
    %467 = vmatpush1.bf16.msra.mxu0 0
    %468 = vmatprep.subr.bf16.mxu0 0
    %469 = vmatpush1.bf16.msra.mxu0 0
    %470 = vmatprep.subr.bf16.mxu0 0
    %471 = vmatpush1.bf16.msra.mxu0 0
    %472 = vmatprep.mubr.bf16.mxu0 0
    %473 = vmatmul.mubr.bf16.gmra.mrb[0].mxu0 %v365
    %v474 = vpop.f32.mrb[0].mxu0
    %v475 = vadd.f32 %v390, %v474
    %v476 = vpop.f32.mrb[0].mxu0
    %v477 = vpop.f32.mrb[0].mxu0
    %v478 = vadd.f32 %v390, %v477
    %v479 = vpop.f32.mrb[0].mxu0
    %480 = vmatprep.mubr.bf16.mxu0 0
    %481 = vmatmul.mubr.bf16.gmra.mrb[0].mxu0 %v366
    %v482 = vpop.f32.mrb[0].mxu0
    %v483 = vadd.f32 %v390, %v482
    %v484 = vpop.f32.mrb[0].mxu0
    %v485 = vpop.f32.mrb[0].mxu0
    %v486 = vadd.f32 %v390, %v485
    %v487 = vpop.f32.mrb[0].mxu0
    %488 = vmatprep.mubr.bf16.mxu0 0
    %489 = vmatmul.mubr.bf16.gmra.mrb[0].mxu0 %v367
    %v490 = vpop.f32.mrb[0].mxu0
    %v491 = vadd.f32 %v390, %v490
    %v492 = vpop.f32.mrb[0].mxu0
    %v493 = vpop.f32.mrb[0].mxu0
    %v494 = vadd.f32 %v390, %v493
    %v495 = vpop.f32.mrb[0].mxu0
    %496 = vmatprep.mubr.bf16.mxu0 0
    %497 = vmatmul.mubr.bf16.gmra.mrb[0].mxu0 %v368
    %v498 = vpop.f32.mrb[0].mxu0
    %v499 = vadd.f32 %v390, %v498
    %v500 = vpop.f32.mrb[0].mxu0
    %v501 = vpop.f32.mrb[0].mxu0
    %v502 = vadd.f32 %v390, %v501
    %v503 = vpop.f32.mrb[0].mxu0
    %504 = vdwg.mxu0
    %505 = vst [vmem:[%s7] sm:$0xff] %v475
    %506 = vst [vmem:[%s7 + $0x8] sm:$0xff] %v478
    %507 = vst [vmem:[%s7 + $0x10] sm:$0xff] %v483
    %508 = vst [vmem:[%s7 + $0x18] sm:$0xff] %v486
    %509 = vst [vmem:[%s7 + $0x20] sm:$0xff] %v491
    %510 = vst [vmem:[%s7 + $0x28] sm:$0xff] %v494
    %511 = vst [vmem:[%s7 + $0x30] sm:$0xff] %v499
    %512 = vst [vmem:[%s7 + $0x38] sm:$0xff] %v502
    // Predicated region
    $region34: #{_mlp_forward_impl.1} parent=1 // pred_check
      _
    $region35: #{_mlp_forward_impl.1} parent=1 // pred_check_branch
      %514 = sbr.rel (0) target = $region37
    $region36: #{_mlp_forward_impl.1} parent=1 // pred_region
      _
    $region37: #{_mlp_forward_impl.1} parent=1 // pred_fallthru
      _
    // Predicated region
    $region38: #{_mlp_forward_impl.1} parent=1 // pred_check
      _
    $region39: #{_mlp_forward_impl.1} parent=1 // pred_check_branch
      %516 = sbr.rel (0) target = $region41
    $region40: #{_mlp_forward_impl.1} parent=1 // pred_region
      _
    $region41: #{_mlp_forward_impl.1} parent=1 // pred_fallthru
      _
    %517 = vsyncpa [#allocation3], 1

// kernel: _mlp_forward_impl.1
$region0: #{_mlp_forward_impl.1}
  #allocation0 [shape = 'u32[]', space=smem, size = 0x4, offset = 0x4, fixed_abs, tag = 'smem constant byte address 0x4 - core index']
  #allocation1 [shape = 'u32[144,128]{1,0:T(1,128)}', space=vmem, size = 0x12000, scoped, tag = 'internal scratch']
  %s0 = inlined_call_operand.vmem [shape: bf16[64,128], index: 0, kind: input, shape index: {}]
  %s1 = inlined_call_operand.vmem [shape: bf16[128,128], index: 1, kind: input, shape index: {}]
  %s2 = inlined_call_operand.vmem [shape: f32[1,128], index: 2, kind: input, shape index: {}]
  %s3 = inlined_call_operand.vmem [shape: bf16[128,128], index: 3, kind: input, shape index: {}]
  %s4 = inlined_call_operand.vmem [shape: f32[1,128], index: 4, kind: input, shape index: {}]
  %s5 = inlined_call_operand.hbm [shape: bf16[128,128], index: 5, kind: input, shape index: {}]
  %s6 = inlined_call_operand.vmem [shape: f32[1,128], index: 6, kind: input, shape index: {}]
  %s7 = inlined_call_operand.vmem [shape: f32[64,128], index: 7, kind: output, shape index: {}]
  %s8 = sld [smem:[#allocation0]]
  $region42: #{_mlp_forward_impl.1} parent=0
    _
  %s10 = ssub.s32 1, %s8
  %s11 = scalar_select 0, %s10, %s8
  $region1: #{_mlp_forward_impl.1} parent=0
    #allocation2 [shape = 'u8[32768]{0}', space=vmem, size = 0x8000, scoped, tag = 'input window, operand 5, single buffered']
    #allocation3 [shape = 's32[1]{0}', space=sflag, size = 0x4, scoped, tag = 'scoped memory for _mlp_forward_impl.1']
    %12 = vsyncpa [#allocation3], 0
    // Predicated region
    $region2: #{_mlp_forward_impl.1} parent=1 // pred_check
      _
    $region3: #{_mlp_forward_impl.1} parent=1 // pred_check_branch
      %14 = sbr.rel (0) target = $region5
    $region4: #{_mlp_forward_impl.1} parent=1 // pred_region
      _
    $region5: #{_mlp_forward_impl.1} parent=1 // pred_fallthru
      _
    // Predicated region
    $region6: #{_mlp_forward_impl.1} parent=1 // pred_check
      _
    $region7: #{_mlp_forward_impl.1} parent=1 // pred_check_branch
      %16 = sbr.rel (0) target = $region9
    $region8: #{_mlp_forward_impl.1} parent=1 // pred_region
      _
    $region9: #{_mlp_forward_impl.1} parent=1 // pred_fallthru
      _
    // Predicated region
    $region10: #{_mlp_forward_impl.1} parent=1 // pred_check
      _
    $region11: #{_mlp_forward_impl.1} parent=1 // pred_check_branch
      %18 = sbr.rel (0) target = $region13
    $region12: #{_mlp_forward_impl.1} parent=1 // pred_region
      _
    $region13: #{_mlp_forward_impl.1} parent=1 // pred_fallthru
      _
    // Predicated region
    $region14: #{_mlp_forward_impl.1} parent=1 // pred_check
      _
    $region15: #{_mlp_forward_impl.1} parent=1 // pred_check_branch
      %20 = sbr.rel (0) target = $region17
    $region16: #{_mlp_forward_impl.1} parent=1 // pred_region
      _
    $region17: #{_mlp_forward_impl.1} parent=1 // pred_fallthru
      _
    // Predicated region
    $region18: #{_mlp_forward_impl.1} parent=1 // pred_check
      _
    $region19: #{_mlp_forward_impl.1} parent=1 // pred_check_branch
      %22 = sbr.rel (0) target = $region21
    $region20: #{_mlp_forward_impl.1} parent=1 // pred_region
      _
    $region21: #{_mlp_forward_impl.1} parent=1 // pred_fallthru
      _
    // Predicated region
    $region22: #{_mlp_forward_impl.1} parent=1 // pred_check
      _
    $region23: #{_mlp_forward_impl.1} parent=1 // pred_check_branch
      %24 = sbr.rel (0) target = $region25
    $region24: #{_mlp_forward_impl.1} parent=1 // pred_region
      %s26 = ssub.s32 1024, 1024
      %27 = vsyncadd [#allocation3], %s26
      %s28 = sshll.u32 [#allocation2], 4
      %s29 = int_to_ptr.vmem [resolvable:$true] %s28
      %34 = dma.hbm_to_vmem [thread:$0]  %s5, 1024, %s29, [#allocation3], 64, 64, 4
    $region25: #{_mlp_forward_impl.1} parent=1 // pred_fallthru
      _
    // Predicated region
    $region26: #{_mlp_forward_impl.1} parent=1 // pred_check
      _
    $region27: #{_mlp_forward_impl.1} parent=1 // pred_check_branch
      %36 = sbr.rel (0) target = $region29
    $region28: #{_mlp_forward_impl.1} parent=1 // pred_region
      _
    $region29: #{_mlp_forward_impl.1} parent=1 // pred_fallthru
      _
    // Predicated region
    $region30: #{_mlp_forward_impl.1} parent=1 // pred_check
      _
    $region31: #{_mlp_forward_impl.1} parent=1 // pred_check_branch
      %38 = sbr.rel (0) target = $region33
    $region32: #{_mlp_forward_impl.1} parent=1 // pred_region
      %39 = dma.done [#allocation3], 1024
    $region33: #{_mlp_forward_impl.1} parent=1 // pred_fallthru
      _
    %v41 = vld [vmem:[%s0] sm:$0xf]
    %v42 = vld [vmem:[%s0 + $0x4] sm:$0xf]
    %v43 = vld [vmem:[%s0 + $0x8] sm:$0xf]
    %v44 = vld [vmem:[%s0 + $0xc] sm:$0xf]
    %v45 = vld [vmem:[%s0 + $0x10] sm:$0xf]
    %v46 = vld [vmem:[%s0 + $0x14] sm:$0xf]
    %v47 = vld [vmem:[%s0 + $0x18] sm:$0xf]
    %v48 = vld [vmem:[%s0 + $0x1c] sm:$0xf]
    %v49 = vld [vmem:[%s1] sm:$0xf]
    %v50 = vld [vmem:[%s1 + $0x4] sm:$0xf]
    %v51 = vld [vmem:[%s1 + $0x8] sm:$0xf]
    %v52 = vld [vmem:[%s1 + $0xc] sm:$0xf]
    %v53 = vld [vmem:[%s1 + $0x10] sm:$0xf]
    %v54 = vld [vmem:[%s1 + $0x14] sm:$0xf]
    %v55 = vld [vmem:[%s1 + $0x18] sm:$0xf]
    %v56 = vld [vmem:[%s1 + $0x1c] sm:$0xf]
    %v57 = vld [vmem:[%s1 + $0x20] sm:$0xf]
    %v58 = vld [vmem:[%s1 + $0x24] sm:$0xf]
    %v59 = vld [vmem:[%s1 + $0x28] sm:$0xf]
    %v60 = vld [vmem:[%s1 + $0x2c] sm:$0xf]
    %v61 = vld [vmem:[%s1 + $0x30] sm:$0xf]
    %v62 = vld [vmem:[%s1 + $0x34] sm:$0xf]
    %v63 = vld [vmem:[%s1 + $0x38] sm:$0xf]
    %v64 = vld [vmem:[%s1 + $0x3c] sm:$0xf]
    %v65 = vld [vmem:[%s2] sm:$0x1]
    %v67 = vlaneseq
    %v68 = vshrl.u32 %v67, 7
    %v69 = vsub.s32 0, %v68
    %v70 = vrot.slane %v65, %v69
    %v80 = vunpack.c.l.b16 %v41
    %v81 = vunpack.c.l.b16 %v42
    %v82 = vunpack.c.l.b16 %v43
    %v83 = vunpack.c.l.b16 %v44
    %v84 = vunpack.c.l.b16 %v45
    %v85 = vunpack.c.l.b16 %v46
    %v86 = vunpack.c.l.b16 %v47
    %v87 = vunpack.c.l.b16 %v48
    %v88 = vpack.c.b16 %v81, %v80
    %v89 = vpack.c.b16 %v83, %v82
    %v90 = vpack.c.b16 %v85, %v84
    %v91 = vpack.c.b16 %v87, %v86
    %v112 = vunpack.c.l.b16 %v49
    %v113 = vunpack.c.l.b16 %v50
    %v114 = vunpack.c.l.b16 %v51
    %v115 = vunpack.c.l.b16 %v52
    %v116 = vunpack.c.l.b16 %v53
    %v117 = vunpack.c.l.b16 %v54
    %v118 = vunpack.c.l.b16 %v55
    %v119 = vunpack.c.l.b16 %v56
    %v120 = vunpack.c.l.b16 %v57
    %v121 = vunpack.c.l.b16 %v58
    %v122 = vunpack.c.l.b16 %v59
    %v123 = vunpack.c.l.b16 %v60
    %v124 = vunpack.c.l.b16 %v61
    %v125 = vunpack.c.l.b16 %v62
    %v126 = vunpack.c.l.b16 %v63
    %v127 = vunpack.c.l.b16 %v64
    %v128 = vpack.c.b16 %v113, %v112
    %v129 = vpack.c.b16 %v115, %v114
    %v130 = vpack.c.b16 %v117, %v116
    %v131 = vpack.c.b16 %v119, %v118
    %v132 = vpack.c.b16 %v121, %v120
    %v133 = vpack.c.b16 %v123, %v122
    %v134 = vpack.c.b16 %v125, %v124
    %v135 = vpack.c.b16 %v127, %v126
    %144 = vmatprep.subr.bf16.mxu0 0
    %145 = vmatpush1.bf16.msra.mxu0 %v128
    %146 = vmatprep.subr.bf16.mxu0 0
    %147 = vmatpush1.bf16.msra.mxu0 %v129
    %148 = vmatprep.subr.bf16.mxu0 0
    %149 = vmatpush1.bf16.msra.mxu0 %v130
    %150 = vmatprep.subr.bf16.mxu0 0
    %151 = vmatpush1.bf16.msra.mxu0 %v131
    %152 = vmatprep.subr.bf16.mxu0 0
    %153 = vmatpush1.bf16.msra.mxu0 %v132
    %154 = vmatprep.subr.bf16.mxu0 0
    %155 = vmatpush1.bf16.msra.mxu0 %v133
    %156 = vmatprep.subr.bf16.mxu0 0
    %157 = vmatpush1.bf16.msra.mxu0 %v134
    %158 = vmatprep.subr.bf16.mxu0 0
    %159 = vmatpush1.bf16.msra.mxu0 %v135
    %160 = vmatprep.subr.bf16.mxu0 0
    %161 = vmatpush1.bf16.msra.mxu0 0
    %162 = vmatprep.subr.bf16.mxu0 0
    %163 = vmatpush1.bf16.msra.mxu0 0
    %164 = vmatprep.subr.bf16.mxu0 0
    %165 = vmatpush1.bf16.msra.mxu0 0
    %166 = vmatprep.subr.bf16.mxu0 0
    %167 = vmatpush1.bf16.msra.mxu0 0
    %168 = vmatprep.subr.bf16.mxu0 0
    %169 = vmatpush1.bf16.msra.mxu0 0
    %170 = vmatprep.subr.bf16.mxu0 0
    %171 = vmatpush1.bf16.msra.mxu0 0
    %172 = vmatprep.subr.bf16.mxu0 0
    %173 = vmatpush1.bf16.msra.mxu0 0
    %174 = vmatprep.subr.bf16.mxu0 0
    %175 = vmatpush1.bf16.msra.mxu0 0
    %176 = vmatprep.mubr.bf16.mxu0 0
    %177 = vmatmul.mubr.bf16.gmra.mrb[0].mxu0 %v88
    %v178 = vpop.f32.mrb[0].mxu0
    %v179 = vadd.f32 %v70, %v178
    %v180 = vpop.f32.mrb[0].mxu0
    %v181 = vpop.f32.mrb[0].mxu0
    %v182 = vadd.f32 %v70, %v181
    %v183 = vpop.f32.mrb[0].mxu0
    %184 = vmatprep.mubr.bf16.mxu0 0
    %185 = vmatmul.mubr.bf16.gmra.mrb[0].mxu0 %v89
    %v186 = vpop.f32.mrb[0].mxu0
    %v187 = vadd.f32 %v70, %v186
    %v188 = vpop.f32.mrb[0].mxu0
    %v189 = vpop.f32.mrb[0].mxu0
    %v190 = vadd.f32 %v70, %v189
    %v191 = vpop.f32.mrb[0].mxu0
    %192 = vmatprep.mubr.bf16.mxu0 0
    %193 = vmatmul.mubr.bf16.gmra.mrb[0].mxu0 %v90
    %v194 = vpop.f32.mrb[0].mxu0
    %v195 = vadd.f32 %v70, %v194
    %v196 = vpop.f32.mrb[0].mxu0
    %v197 = vpop.f32.mrb[0].mxu0
    %v198 = vadd.f32 %v70, %v197
    %v199 = vpop.f32.mrb[0].mxu0
    %200 = vmatprep.mubr.bf16.mxu0 0
    %201 = vmatmul.mubr.bf16.gmra.mrb[0].mxu0 %v91
    %v202 = vpop.f32.mrb[0].mxu0
    %v203 = vadd.f32 %v70, %v202
    %v204 = vpop.f32.mrb[0].mxu0
    %v205 = vpop.f32.mrb[0].mxu0
    %v206 = vadd.f32 %v70, %v205
    %v207 = vpop.f32.mrb[0].mxu0
    %208 = vdwg.mxu0
    %v209 = vmax.f32 %v179, 0.0
    %v210 = vmax.f32 %v182, 0.0
    %v211 = vmax.f32 %v187, 0.0
    %v212 = vmax.f32 %v190, 0.0
    %v213 = vmax.f32 %v195, 0.0
    %v214 = vmax.f32 %v198, 0.0
    %v215 = vmax.f32 %v203, 0.0
    %v216 = vmax.f32 %v206, 0.0
    %v217 = vpack.c.bf16 %v210, %v209
    %v218 = vpack.c.bf16 %v212, %v211
    %v219 = vpack.c.bf16 %v214, %v213
    %v220 = vpack.c.bf16 %v216, %v215
    %v221 = vld [vmem:[%s3] sm:$0xf]
    %v222 = vld [vmem:[%s3 + $0x4] sm:$0xf]
    %v223 = vld [vmem:[%s3 + $0x8] sm:$0xf]
    %v224 = vld [vmem:[%s3 + $0xc] sm:$0xf]
    %v225 = vld [vmem:[%s3 + $0x10] sm:$0xf]
    %v226 = vld [vmem:[%s3 + $0x14] sm:$0xf]
    %v227 = vld [vmem:[%s3 + $0x18] sm:$0xf]
    %v228 = vld [vmem:[%s3 + $0x1c] sm:$0xf]
    %v229 = vld [vmem:[%s3 + $0x20] sm:$0xf]
    %v230 = vld [vmem:[%s3 + $0x24] sm:$0xf]
    %v231 = vld [vmem:[%s3 + $0x28] sm:$0xf]
    %v232 = vld [vmem:[%s3 + $0x2c] sm:$0xf]
    %v233 = vld [vmem:[%s3 + $0x30] sm:$0xf]
    %v234 = vld [vmem:[%s3 + $0x34] sm:$0xf]
    %v235 = vld [vmem:[%s3 + $0x38] sm:$0xf]
    %v236 = vld [vmem:[%s3 + $0x3c] sm:$0xf]
    %v237 = vld [vmem:[%s4] sm:$0x1]
    %v239 = vlaneseq
    %v240 = vshrl.u32 %v239, 7
    %v241 = vsub.s32 0, %v240
    %v242 = vrot.slane %v237, %v241
    %v260 = vunpack.c.l.b16 %v221
    %v261 = vunpack.c.l.b16 %v222
    %v262 = vunpack.c.l.b16 %v223
    %v263 = vunpack.c.l.b16 %v224
    %v264 = vunpack.c.l.b16 %v225
    %v265 = vunpack.c.l.b16 %v226
    %v266 = vunpack.c.l.b16 %v227
    %v267 = vunpack.c.l.b16 %v228
    %v268 = vunpack.c.l.b16 %v229
    %v269 = vunpack.c.l.b16 %v230
    %v270 = vunpack.c.l.b16 %v231
    %v271 = vunpack.c.l.b16 %v232
    %v272 = vunpack.c.l.b16 %v233
    %v273 = vunpack.c.l.b16 %v234
    %v274 = vunpack.c.l.b16 %v235
    %v275 = vunpack.c.l.b16 %v236
    %v276 = vpack.c.b16 %v261, %v260
    %v277 = vpack.c.b16 %v263, %v262
    %v278 = vpack.c.b16 %v265, %v264
    %v279 = vpack.c.b16 %v267, %v266
    %v280 = vpack.c.b16 %v269, %v268
    %v281 = vpack.c.b16 %v271, %v270
    %v282 = vpack.c.b16 %v273, %v272
    %v283 = vpack.c.b16 %v275, %v274
    %292 = vmatprep.subr.bf16.mxu0 0
    %293 = vmatpush1.bf16.msra.mxu0 %v276
    %294 = vmatprep.subr.bf16.mxu0 0
    %295 = vmatpush1.bf16.msra.mxu0 %v277
    %296 = vmatprep.subr.bf16.mxu0 0
    %297 = vmatpush1.bf16.msra.mxu0 %v278
    %298 = vmatprep.subr.bf16.mxu0 0
    %299 = vmatpush1.bf16.msra.mxu0 %v279
    %300 = vmatprep.subr.bf16.mxu0 0
    %301 = vmatpush1.bf16.msra.mxu0 %v280
    %302 = vmatprep.subr.bf16.mxu0 0
    %303 = vmatpush1.bf16.msra.mxu0 %v281
    %304 = vmatprep.subr.bf16.mxu0 0
    %305 = vmatpush1.bf16.msra.mxu0 %v282
    %306 = vmatprep.subr.bf16.mxu0 0
    %307 = vmatpush1.bf16.msra.mxu0 %v283
    %308 = vmatprep.subr.bf16.mxu0 0
    %309 = vmatpush1.bf16.msra.mxu0 0
    %310 = vmatprep.subr.bf16.mxu0 0
    %311 = vmatpush1.bf16.msra.mxu0 0
    %312 = vmatprep.subr.bf16.mxu0 0
    %313 = vmatpush1.bf16.msra.mxu0 0
    %314 = vmatprep.subr.bf16.mxu0 0
    %315 = vmatpush1.bf16.msra.mxu0 0
    %316 = vmatprep.subr.bf16.mxu0 0
    %317 = vmatpush1.bf16.msra.mxu0 0
    %318 = vmatprep.subr.bf16.mxu0 0
    %319 = vmatpush1.bf16.msra.mxu0 0
    %320 = vmatprep.subr.bf16.mxu0 0
    %321 = vmatpush1.bf16.msra.mxu0 0
    %322 = vmatprep.subr.bf16.mxu0 0
    %323 = vmatpush1.bf16.msra.mxu0 0
    %324 = vmatprep.mubr.bf16.mxu0 0
    %325 = vmatmul.mubr.bf16.gmra.mrb[0].mxu0 %v217
    %v326 = vpop.f32.mrb[0].mxu0
    %v327 = vadd.f32 %v242, %v326
    %v328 = vpop.f32.mrb[0].mxu0
    %v329 = vpop.f32.mrb[0].mxu0
    %v330 = vadd.f32 %v242, %v329
    %v331 = vpop.f32.mrb[0].mxu0
    %332 = vmatprep.mubr.bf16.mxu0 0
    %333 = vmatmul.mubr.bf16.gmra.mrb[0].mxu0 %v218
    %v334 = vpop.f32.mrb[0].mxu0
    %v335 = vadd.f32 %v242, %v334
    %v336 = vpop.f32.mrb[0].mxu0
    %v337 = vpop.f32.mrb[0].mxu0
    %v338 = vadd.f32 %v242, %v337
    %v339 = vpop.f32.mrb[0].mxu0
    %340 = vmatprep.mubr.bf16.mxu0 0
    %341 = vmatmul.mubr.bf16.gmra.mrb[0].mxu0 %v219
    %v342 = vpop.f32.mrb[0].mxu0
    %v343 = vadd.f32 %v242, %v342
    %v344 = vpop.f32.mrb[0].mxu0
    %v345 = vpop.f32.mrb[0].mxu0
    %v346 = vadd.f32 %v242, %v345
    %v347 = vpop.f32.mrb[0].mxu0
    %348 = vmatprep.mubr.bf16.mxu0 0
    %349 = vmatmul.mubr.bf16.gmra.mrb[0].mxu0 %v220
    %v350 = vpop.f32.mrb[0].mxu0
    %v351 = vadd.f32 %v242, %v350
    %v352 = vpop.f32.mrb[0].mxu0
    %v353 = vpop.f32.mrb[0].mxu0
    %v354 = vadd.f32 %v242, %v353
    %v355 = vpop.f32.mrb[0].mxu0
    %356 = vdwg.mxu0
    %v357 = vmax.f32 %v327, 0.0
    %v358 = vmax.f32 %v330, 0.0
    %v359 = vmax.f32 %v335, 0.0
    %v360 = vmax.f32 %v338, 0.0
    %v361 = vmax.f32 %v343, 0.0
    %v362 = vmax.f32 %v346, 0.0
    %v363 = vmax.f32 %v351, 0.0
    %v364 = vmax.f32 %v354, 0.0
    %v365 = vpack.c.bf16 %v358, %v357
    %v366 = vpack.c.bf16 %v360, %v359
    %v367 = vpack.c.bf16 %v362, %v361
    %v368 = vpack.c.bf16 %v364, %v363
    %v369 = vld [vmem:[#allocation2] sm:$0xf]
    %v370 = vld [vmem:[#allocation2 + $0x4] sm:$0xf]
    %v371 = vld [vmem:[#allocation2 + $0x8] sm:$0xf]
    %v372 = vld [vmem:[#allocation2 + $0xc] sm:$0xf]
    %v373 = vld [vmem:[#allocation2 + $0x10] sm:$0xf]
    %v374 = vld [vmem:[#allocation2 + $0x14] sm:$0xf]
    %v375 = vld [vmem:[#allocation2 + $0x18] sm:$0xf]
    %v376 = vld [vmem:[#allocation2 + $0x1c] sm:$0xf]
    %v377 = vld [vmem:[#allocation2 + $0x20] sm:$0xf]
    %v378 = vld [vmem:[#allocation2 + $0x24] sm:$0xf]
    %v379 = vld [vmem:[#allocation2 + $0x28] sm:$0xf]
    %v380 = vld [vmem:[#allocation2 + $0x2c] sm:$0xf]
    %v381 = vld [vmem:[#allocation2 + $0x30] sm:$0xf]
    %v382 = vld [vmem:[#allocation2 + $0x34] sm:$0xf]
    %v383 = vld [vmem:[#allocation2 + $0x38] sm:$0xf]
    %v384 = vld [vmem:[#allocation2 + $0x3c] sm:$0xf]
    %v385 = vld [vmem:[%s6] sm:$0x1]
    %v387 = vlaneseq
    %v388 = vshrl.u32 %v387, 7
    %v389 = vsub.s32 0, %v388
    %v390 = vrot.slane %v385, %v389
    %v408 = vunpack.c.l.b16 %v369
    %v409 = vunpack.c.l.b16 %v370
    %v410 = vunpack.c.l.b16 %v371
    %v411 = vunpack.c.l.b16 %v372
    %v412 = vunpack.c.l.b16 %v373
    %v413 = vunpack.c.l.b16 %v374
    %v414 = vunpack.c.l.b16 %v375
    %v415 = vunpack.c.l.b16 %v376
    %v416 = vunpack.c.l.b16 %v377
    %v417 = vunpack.c.l.b16 %v378
    %v418 = vunpack.c.l.b16 %v379
    %v419 = vunpack.c.l.b16 %v380
    %v420 = vunpack.c.l.b16 %v381
    %v421 = vunpack.c.l.b16 %v382
    %v422 = vunpack.c.l.b16 %v383
    %v423 = vunpack.c.l.b16 %v384
    %v424 = vpack.c.b16 %v409, %v408
    %v425 = vpack.c.b16 %v411, %v410
    %v426 = vpack.c.b16 %v413, %v412
    %v427 = vpack.c.b16 %v415, %v414
    %v428 = vpack.c.b16 %v417, %v416
    %v429 = vpack.c.b16 %v419, %v418
    %v430 = vpack.c.b16 %v421, %v420
    %v431 = vpack.c.b16 %v423, %v422
    %440 = vmatprep.subr.bf16.mxu0 0
    %441 = vmatpush1.bf16.msra.mxu0 %v424
    %442 = vmatprep.subr.bf16.mxu0 0
    %443 = vmatpush1.bf16.msra.mxu0 %v425
    %444 = vmatprep.subr.bf16.mxu0 0
    %445 = vmatpush1.bf16.msra.mxu0 %v426
    %446 = vmatprep.subr.bf16.mxu0 0
    %447 = vmatpush1.bf16.msra.mxu0 %v427
    %448 = vmatprep.subr.bf16.mxu0 0
    %449 = vmatpush1.bf16.msra.mxu0 %v428
    %450 = vmatprep.subr.bf16.mxu0 0
    %451 = vmatpush1.bf16.msra.mxu0 %v429
    %452 = vmatprep.subr.bf16.mxu0 0
    %453 = vmatpush1.bf16.msra.mxu0 %v430
    %454 = vmatprep.subr.bf16.mxu0 0
    %455 = vmatpush1.bf16.msra.mxu0 %v431
    %456 = vmatprep.subr.bf16.mxu0 0
    %457 = vmatpush1.bf16.msra.mxu0 0
    %458 = vmatprep.subr.bf16.mxu0 0
    %459 = vmatpush1.bf16.msra.mxu0 0
    %460 = vmatprep.subr.bf16.mxu0 0
    %461 = vmatpush1.bf16.msra.mxu0 0
    %462 = vmatprep.subr.bf16.mxu0 0
    %463 = vmatpush1.bf16.msra.mxu0 0
    %464 = vmatprep.subr.bf16.mxu0 0
    %465 = vmatpush1.bf16.msra.mxu0 0
    %466 = vmatprep.subr.bf16.mxu0 0
    %467 = vmatpush1.bf16.msra.mxu0 0
    %468 = vmatprep.subr.bf16.mxu0 0
    %469 = vmatpush1.bf16.msra.mxu0 0
    %470 = vmatprep.subr.bf16.mxu0 0
    %471 = vmatpush1.bf16.msra.mxu0 0
    %472 = vmatprep.mubr.bf16.mxu0 0
    %473 = vmatmul.mubr.bf16.gmra.mrb[0].mxu0 %v365
    %v474 = vpop.f32.mrb[0].mxu0
    %v475 = vadd.f32 %v390, %v474
    %v476 = vpop.f32.mrb[0].mxu0
    %v477 = vpop.f32.mrb[0].mxu0
    %v478 = vadd.f32 %v390, %v477
    %v479 = vpop.f32.mrb[0].mxu0
    %480 = vmatprep.mubr.bf16.mxu0 0
    %481 = vmatmul.mubr.bf16.gmra.mrb[0].mxu0 %v366
    %v482 = vpop.f32.mrb[0].mxu0
    %v483 = vadd.f32 %v390, %v482
    %v484 = vpop.f32.mrb[0].mxu0
    %v485 = vpop.f32.mrb[0].mxu0
    %v486 = vadd.f32 %v390, %v485
    %v487 = vpop.f32.mrb[0].mxu0
    %488 = vmatprep.mubr.bf16.mxu0 0
    %489 = vmatmul.mubr.bf16.gmra.mrb[0].mxu0 %v367
    %v490 = vpop.f32.mrb[0].mxu0
    %v491 = vadd.f32 %v390, %v490
    %v492 = vpop.f32.mrb[0].mxu0
    %v493 = vpop.f32.mrb[0].mxu0
    %v494 = vadd.f32 %v390, %v493
    %v495 = vpop.f32.mrb[0].mxu0
    %496 = vmatprep.mubr.bf16.mxu0 0
    %497 = vmatmul.mubr.bf16.gmra.mrb[0].mxu0 %v368
    %v498 = vpop.f32.mrb[0].mxu0
    %v499 = vadd.f32 %v390, %v498
    %v500 = vpop.f32.mrb[0].mxu0
    %v501 = vpop.f32.mrb[0].mxu0
    %v502 = vadd.f32 %v390, %v501
    %v503 = vpop.f32.mrb[0].mxu0
    %504 = vdwg.mxu0
    %505 = vst [vmem:[%s7] sm:$0xff] %v475
    %506 = vst [vmem:[%s7 + $0x8] sm:$0xff] %v478
    %507 = vst [vmem:[%s7 + $0x10] sm:$0xff] %v483
    %508 = vst [vmem:[%s7 + $0x18] sm:$0xff] %v486
    %509 = vst [vmem:[%s7 + $0x20] sm:$0xff] %v491
    %510 = vst [vmem:[%s7 + $0x28] sm:$0xff] %v494
    %511 = vst [vmem:[%s7 + $0x30] sm:$0xff] %v499
    %512 = vst [vmem:[%s7 + $0x38] sm:$0xff] %v502
    // Predicated region
    $region34: #{_mlp_forward_impl.1} parent=1 // pred_check
      _
    $region35: #{_mlp_forward_impl.1} parent=1 // pred_check_branch
      %514 = sbr.rel (0) target = $region37
    $region36: #{_mlp_forward_impl.1} parent=1 // pred_region
      _
    $region37: #{_mlp_forward_impl.1} parent=1 // pred_fallthru
      _
    // Predicated region
    $region38: #{_mlp_forward_impl.1} parent=1 // pred_check
      _
    $region39: #{_mlp_forward_impl.1} parent=1 // pred_check_branch
      %516 = sbr.rel (0) target = $region41
    $region40: #{_mlp_forward_impl.1} parent=1 // pred_region
      _
    $region41: #{_mlp_forward_impl.1} parent=1 // pred_fallthru
      _
    %517 = vsyncpa [#allocation3], 1

</llo_original>
